<compile_context>
chip_gen: v7x
topology: tpu7x:2x2x1
jax: 0.10.0
libtpu: 0.0.40
codegen_flags: <defaults>
</compile_context>

<pallas_src>
import functools

import jax
import jax.numpy as jnp
from jax.experimental import pallas as pl
from jax.experimental.pallas import tpu as pltpu


# ----------------------------------------------------------------------------
# Fused kernel: FC -> (Conv1d + ReLU) -> (Conv1d + ReLU) -> Conv1d
# ----------------------------------------------------------------------------
def _decoder_kernel(z_ref, wfc_ref, bfc_ref,
                    w1_ref, b1_ref, w2_ref, b2_ref, w3_ref, b3_ref,
                    o_ref, *, batch, seq_len, latent_dim):
    B, T, L = batch, seq_len, latent_dim
    M = B * T

    # --- FC: build channels-last, batch-flattened activation x0 (B*T, 32) ---
    # x0[b*T + t, c] = sum_l z[b, l] * wfc[l, t, c] + bfc[t, c]
    # L is small -> rank-1 accumulation on the VPU using SMEM scalars; this
    # produces the flat (B*T, 32) layout directly, with no in-kernel reshape.
    w_slices = [wfc_ref[l] for l in range(L)]            # each (T, 32)
    bias_fc = bfc_ref[...]                               # (T, 32)
    blocks = []
    for b in range(B):
        acc = bias_fc
        for l in range(L):
            acc = acc + z_ref[b, l] * w_slices[l]        # scalar * (T, 32)
        blocks.append(acc)
    x0 = blocks[0] if B == 1 else jnp.concatenate(blocks, axis=0)   # (M, 32)

    # --- halo masks: one (M, 1) column, reused by every layer ----------------
    row = jax.lax.broadcasted_iota(jnp.int32, (M, 1), 0)
    tpos = row % T
    not_first = (tpos != 0).astype(jnp.float32)          # kill x[t-1] at t == 0
    not_last = (tpos != T - 1).astype(jnp.float32)       # kill x[t+1] at t == T-1

    def conv_layer(h, w_ref, b_ref, relu):
        # h: (M, Cin); w_ref: (3*Cin, Cout), tap order [x[t-1], x[t], x[t+1]].
        h_prev = not_first * pltpu.roll(h, shift=1, axis=0)
        h_next = not_last * pltpu.roll(h, shift=M - 1, axis=0)
        hcat = jnp.concatenate([h_prev, h, h_next], axis=1)          # (M, 3*Cin)
        y = jnp.dot(hcat, w_ref[...], preferred_element_type=jnp.float32)
        y = y + b_ref[...]
        return jnp.maximum(y, 0.0) if relu else y

    h1 = conv_layer(x0, w1_ref, b1_ref, relu=True)        # (M, 64)
    h2 = conv_layer(h1, w2_ref, b2_ref, relu=True)        # (M, 32)
    h3 = conv_layer(h2, w3_ref, b3_ref, relu=False)       # (M, F)

    # NOTE: F < 128 so this single small store is lane-masked; making it
    # lane-dense (e.g. a (B, T*F) slab) would need an in-kernel lane-merging
    # relayout that costs more than it saves at these sizes.
    o_ref[...] = h3.astype(o_ref.dtype)


# ----------------------------------------------------------------------------
# One-time parameter preprocessing (PyTorch layouts -> kernel layouts)
# ----------------------------------------------------------------------------
def preprocess_params(params, seq_len):
    W_fc, b_fc, W1, b1, W2, b2, W3, b3 = params
    T = seq_len
    L = W_fc.shape[1]

    # fc weight (32*T, L), row index c*T + t  ->  (L, T, 32) so the fc output
    # comes out channels-last with no activation transpose.
    wfc = jnp.transpose(W_fc.reshape(32, T, L), (2, 1, 0))
    bfc = jnp.transpose(b_fc.reshape(32, T))                         # (T, 32)

    # Conv1d weight (Cout, Cin, 3) -> merged-tap (3*Cin, Cout):
    # row k*Cin + ci  holds  W[:, ci, k]  (tap order x[t-1], x[t], x[t+1]).
    def merge(w):
        cout, cin, k = w.shape
        return jnp.transpose(w, (2, 1, 0)).reshape(k * cin, cout)

    return (wfc, bfc,
            merge(W1), b1[None, :],
            merge(W2), b2[None, :],
            merge(W3), b3[None, :])


# ----------------------------------------------------------------------------
# Forward wrapper (single pallas_call)
# ----------------------------------------------------------------------------
def conv1d_decoder_forward(z, pre_params, seq_len, output_features):
    wfc, bfc, w1, b1, w2, b2, w3, b3 = pre_params
    B, L = z.shape
    T, F = seq_len, output_features
    M = B * T

    kernel = functools.partial(_decoder_kernel, batch=B, seq_len=T, latent_dim=L)
    full = lambda shape: pl.BlockSpec(shape, lambda *_: (0,) * len(shape))

    out_flat = pl.pallas_call(
        kernel,
        out_shape=jax.ShapeDtypeStruct((M, F), jnp.float32),
        grid=(1,),
        in_specs=[
            pl.BlockSpec(memory_space=pltpu.MemorySpace.SMEM),   # z scalars
            full(wfc.shape), full(bfc.shape),
            full(w1.shape), full(b1.shape),
            full(w2.shape), full(b2.shape),
            full(w3.shape), full(b3.shape),
        ],
        out_specs=full((M, F)),
        compiler_params=pltpu.CompilerParams(dimension_semantics=("arbitrary",)),
    )(z, wfc, bfc, w1, b1, w2, b2, w3, b3)

    # (B*T, F) -> (B, T, F): contiguous, metadata-only reshape.
    return out_flat.reshape(B, T, F)


# ----------------------------------------------------------------------------
# Pure-JAX reference (mirrors PyTorch exactly) for verification
# ----------------------------------------------------------------------------
def reference_forward(z, params, seq_len, output_features):
    W_fc, b_fc, W1, b1, W2, b2, W3, b3 = params
    B = z.shape[0]
    T = seq_len

    def conv1d_ref(x, w, b):  # x (B, Cin, T), w (Cout, Cin, 3)
        xp = jnp.pad(x, ((0, 0), (0, 0), (1, 1)))
        y = sum(
            jnp.einsum("oc,bct->bot", w[:, :, k], xp[:, :, k:k + T])
            for k in range(3)
        )
        return y + b[None, :, None]

    h = z @ W_fc.T + b_fc
    h = h.reshape(B, 32, T)
    h = jnp.maximum(conv1d_ref(h, W1, b1), 0.0)
    h = jnp.maximum(conv1d_ref(h, W2, b2), 0.0)
    h = conv1d_ref(h, W3, b3)
    return jnp.transpose(h, (0, 2, 1))


if __name__ == "__main__":
    # Small shapes consistent with the module
    B, latent_dim, seq_len, output_features = 2, 8, 16, 4
    T, F = seq_len, output_features

    key = jax.random.PRNGKey(0)
    ks = jax.random.split(key, 16)

    z = jax.random.normal(ks[0], (B, latent_dim), dtype=jnp.float32)

    # Deterministic synthetic parameters (PyTorch shapes)
    W_fc = 0.1 * jax.random.normal(ks[1], (32 * T, latent_dim), dtype=jnp.float32)
    b_fc = 0.1 * jax.random.normal(ks[2], (32 * T,), dtype=jnp.float32)
    W1 = 0.1 * jax.random.normal(ks[3], (64, 32, 3), dtype=jnp.float32)
    b1 = 0.1 * jax.random.normal(ks[4], (64,), dtype=jnp.float32)
    W2 = 0.1 * jax.random.normal(ks[5], (32, 64, 3), dtype=jnp.float32)
    b2 = 0.1 * jax.random.normal(ks[6], (32,), dtype=jnp.float32)
    W3 = 0.1 * jax.random.normal(ks[7], (F, 32, 3), dtype=jnp.float32)
    b3 = 0.1 * jax.random.normal(ks[8], (F,), dtype=jnp.float32)

    params = (W_fc, b_fc, W1, b1, W2, b2, W3, b3)

    # One-time weight preprocessing (outside the hot path).
    pre = jax.tree.map(jax.block_until_ready, preprocess_params(params, seq_len))

    fwd = jax.jit(functools.partial(
        conv1d_decoder_forward, seq_len=seq_len, output_features=output_features))
    out = jax.block_until_ready(fwd(z, pre))

    ref = reference_forward(z, params, seq_len, output_features)
    assert out.shape == (B, T, F), out.shape
    max_err = float(jnp.max(jnp.abs(out - ref)))
    assert max_err < 1e-4, f"mismatch vs reference: {max_err}"

    print("KERNEL_OK")
</pallas_src>

<mosaic_0001>
module attributes {stable_mosaic.version = 11 : i64} {
  func.func @_decoder_kernel(%arg0: i32, %arg1: memref<2x8xf32, #tpu.memory_space<smem>>, %arg2: memref<8x16x32xf32, #tpu.memory_space<vmem>>, %arg3: memref<16x32xf32, #tpu.memory_space<vmem>>, %arg4: memref<96x64xf32, #tpu.memory_space<vmem>>, %arg5: memref<1x64xf32, #tpu.memory_space<vmem>>, %arg6: memref<192x32xf32, #tpu.memory_space<vmem>>, %arg7: memref<1x32xf32, #tpu.memory_space<vmem>>, %arg8: memref<96x4xf32, #tpu.memory_space<vmem>>, %arg9: memref<1x4xf32, #tpu.memory_space<vmem>>, %arg10: memref<32x4xf32, #tpu.memory_space<vmem>>) attributes {dimension_semantics = [#tpu.dimension_semantics<arbitrary>], iteration_bounds = array<i64: 1>, scalar_prefetch = 0 : i64, scratch_operands = 0 : i64, tpu.core_type = #tpu.core_type<tc>, window_params = [{transform_indices = @transform_0, window_bounds = array<i64: 2, 8>}, {pipeline_mode = #tpu.pipeline_mode<synchronous>, transform_indices = @transform_1, window_bounds = array<i64: 8, 16, 32>}, {pipeline_mode = #tpu.pipeline_mode<synchronous>, transform_indices = @transform_2, window_bounds = array<i64: 16, 32>}, {pipeline_mode = #tpu.pipeline_mode<synchronous>, transform_indices = @transform_3, window_bounds = array<i64: 96, 64>}, {pipeline_mode = #tpu.pipeline_mode<synchronous>, transform_indices = @transform_4, window_bounds = array<i64: 1, 64>}, {pipeline_mode = #tpu.pipeline_mode<synchronous>, transform_indices = @transform_5, window_bounds = array<i64: 192, 32>}, {pipeline_mode = #tpu.pipeline_mode<synchronous>, transform_indices = @transform_6, window_bounds = array<i64: 1, 32>}, {pipeline_mode = #tpu.pipeline_mode<synchronous>, transform_indices = @transform_7, window_bounds = array<i64: 96, 4>}, {pipeline_mode = #tpu.pipeline_mode<synchronous>, transform_indices = @transform_8, window_bounds = array<i64: 1, 4>}, {pipeline_mode = #tpu.pipeline_mode<synchronous>, transform_indices = @transform_9, window_bounds = array<i64: 32, 4>}]} {
    %c0 = arith.constant 0 : index
    %c0_0 = arith.constant 0 : index
    %c0_1 = arith.constant 0 : index
    %0 = vector.load %arg2[%c0, %c0_0, %c0_1] : memref<8x16x32xf32, #tpu.memory_space<vmem>>, vector<1x16x32xf32>
    %1 = vector.shape_cast %0 : vector<1x16x32xf32> to vector<16x32xf32>
    %c1 = arith.constant 1 : index
    %c0_2 = arith.constant 0 : index
    %c0_3 = arith.constant 0 : index
    %2 = vector.load %arg2[%c1, %c0_2, %c0_3] : memref<8x16x32xf32, #tpu.memory_space<vmem>>, vector<1x16x32xf32>
    %3 = vector.shape_cast %2 : vector<1x16x32xf32> to vector<16x32xf32>
    %c2 = arith.constant 2 : index
    %c0_4 = arith.constant 0 : index
    %c0_5 = arith.constant 0 : index
    %4 = vector.load %arg2[%c2, %c0_4, %c0_5] : memref<8x16x32xf32, #tpu.memory_space<vmem>>, vector<1x16x32xf32>
    %5 = vector.shape_cast %4 : vector<1x16x32xf32> to vector<16x32xf32>
    %c3 = arith.constant 3 : index
    %c0_6 = arith.constant 0 : index
    %c0_7 = arith.constant 0 : index
    %6 = vector.load %arg2[%c3, %c0_6, %c0_7] : memref<8x16x32xf32, #tpu.memory_space<vmem>>, vector<1x16x32xf32>
    %7 = vector.shape_cast %6 : vector<1x16x32xf32> to vector<16x32xf32>
    %c4 = arith.constant 4 : index
    %c0_8 = arith.constant 0 : index
    %c0_9 = arith.constant 0 : index
    %8 = vector.load %arg2[%c4, %c0_8, %c0_9] : memref<8x16x32xf32, #tpu.memory_space<vmem>>, vector<1x16x32xf32>
    %9 = vector.shape_cast %8 : vector<1x16x32xf32> to vector<16x32xf32>
    %c5 = arith.constant 5 : index
    %c0_10 = arith.constant 0 : index
    %c0_11 = arith.constant 0 : index
    %10 = vector.load %arg2[%c5, %c0_10, %c0_11] : memref<8x16x32xf32, #tpu.memory_space<vmem>>, vector<1x16x32xf32>
    %11 = vector.shape_cast %10 : vector<1x16x32xf32> to vector<16x32xf32>
    %c6 = arith.constant 6 : index
    %c0_12 = arith.constant 0 : index
    %c0_13 = arith.constant 0 : index
    %12 = vector.load %arg2[%c6, %c0_12, %c0_13] : memref<8x16x32xf32, #tpu.memory_space<vmem>>, vector<1x16x32xf32>
    %13 = vector.shape_cast %12 : vector<1x16x32xf32> to vector<16x32xf32>
    %c7 = arith.constant 7 : index
    %c0_14 = arith.constant 0 : index
    %c0_15 = arith.constant 0 : index
    %14 = vector.load %arg2[%c7, %c0_14, %c0_15] : memref<8x16x32xf32, #tpu.memory_space<vmem>>, vector<1x16x32xf32>
    %15 = vector.shape_cast %14 : vector<1x16x32xf32> to vector<16x32xf32>
    %c0_16 = arith.constant 0 : index
    %c0_17 = arith.constant 0 : index
    %16 = vector.load %arg3[%c0_16, %c0_17] : memref<16x32xf32, #tpu.memory_space<vmem>>, vector<16x32xf32>
    %c0_18 = arith.constant 0 : index
    %c0_19 = arith.constant 0 : index
    %17 = memref.load %arg1[%c0_18, %c0_19] : memref<2x8xf32, #tpu.memory_space<smem>>
    %18 = vector.broadcast %17 : f32 to vector<16x32xf32>
    %19 = arith.mulf %18, %1 : vector<16x32xf32>
    %20 = arith.addf %16, %19 : vector<16x32xf32>
    %c0_20 = arith.constant 0 : index
    %c1_21 = arith.constant 1 : index
    %21 = memref.load %arg1[%c0_20, %c1_21] : memref<2x8xf32, #tpu.memory_space<smem>>
    %22 = vector.broadcast %21 : f32 to vector<16x32xf32>
    %23 = arith.mulf %22, %3 : vector<16x32xf32>
    %24 = arith.addf %20, %23 : vector<16x32xf32>
    %c0_22 = arith.constant 0 : index
    %c2_23 = arith.constant 2 : index
    %25 = memref.load %arg1[%c0_22, %c2_23] : memref<2x8xf32, #tpu.memory_space<smem>>
    %26 = vector.broadcast %25 : f32 to vector<16x32xf32>
    %27 = arith.mulf %26, %5 : vector<16x32xf32>
    %28 = arith.addf %24, %27 : vector<16x32xf32>
    %c0_24 = arith.constant 0 : index
    %c3_25 = arith.constant 3 : index
    %29 = memref.load %arg1[%c0_24, %c3_25] : memref<2x8xf32, #tpu.memory_space<smem>>
    %30 = vector.broadcast %29 : f32 to vector<16x32xf32>
    %31 = arith.mulf %30, %7 : vector<16x32xf32>
    %32 = arith.addf %28, %31 : vector<16x32xf32>
    %c0_26 = arith.constant 0 : index
    %c4_27 = arith.constant 4 : index
    %33 = memref.load %arg1[%c0_26, %c4_27] : memref<2x8xf32, #tpu.memory_space<smem>>
    %34 = vector.broadcast %33 : f32 to vector<16x32xf32>
    %35 = arith.mulf %34, %9 : vector<16x32xf32>
    %36 = arith.addf %32, %35 : vector<16x32xf32>
    %c0_28 = arith.constant 0 : index
    %c5_29 = arith.constant 5 : index
    %37 = memref.load %arg1[%c0_28, %c5_29] : memref<2x8xf32, #tpu.memory_space<smem>>
    %38 = vector.broadcast %37 : f32 to vector<16x32xf32>
    %39 = arith.mulf %38, %11 : vector<16x32xf32>
    %40 = arith.addf %36, %39 : vector<16x32xf32>
    %c0_30 = arith.constant 0 : index
    %c6_31 = arith.constant 6 : index
    %41 = memref.load %arg1[%c0_30, %c6_31] : memref<2x8xf32, #tpu.memory_space<smem>>
    %42 = vector.broadcast %41 : f32 to vector<16x32xf32>
    %43 = arith.mulf %42, %13 : vector<16x32xf32>
    %44 = arith.addf %40, %43 : vector<16x32xf32>
    %c0_32 = arith.constant 0 : index
    %c7_33 = arith.constant 7 : index
    %45 = memref.load %arg1[%c0_32, %c7_33] : memref<2x8xf32, #tpu.memory_space<smem>>
    %46 = vector.broadcast %45 : f32 to vector<16x32xf32>
    %47 = arith.mulf %46, %15 : vector<16x32xf32>
    %48 = arith.addf %44, %47 : vector<16x32xf32>
    %c1_34 = arith.constant 1 : index
    %c0_35 = arith.constant 0 : index
    %49 = memref.load %arg1[%c1_34, %c0_35] : memref<2x8xf32, #tpu.memory_space<smem>>
    %50 = vector.broadcast %49 : f32 to vector<16x32xf32>
    %51 = arith.mulf %50, %1 : vector<16x32xf32>
    %52 = arith.addf %16, %51 : vector<16x32xf32>
    %c1_36 = arith.constant 1 : index
    %c1_37 = arith.constant 1 : index
    %53 = memref.load %arg1[%c1_36, %c1_37] : memref<2x8xf32, #tpu.memory_space<smem>>
    %54 = vector.broadcast %53 : f32 to vector<16x32xf32>
    %55 = arith.mulf %54, %3 : vector<16x32xf32>
    %56 = arith.addf %52, %55 : vector<16x32xf32>
    %c1_38 = arith.constant 1 : index
    %c2_39 = arith.constant 2 : index
    %57 = memref.load %arg1[%c1_38, %c2_39] : memref<2x8xf32, #tpu.memory_space<smem>>
    %58 = vector.broadcast %57 : f32 to vector<16x32xf32>
    %59 = arith.mulf %58, %5 : vector<16x32xf32>
    %60 = arith.addf %56, %59 : vector<16x32xf32>
    %c1_40 = arith.constant 1 : index
    %c3_41 = arith.constant 3 : index
    %61 = memref.load %arg1[%c1_40, %c3_41] : memref<2x8xf32, #tpu.memory_space<smem>>
    %62 = vector.broadcast %61 : f32 to vector<16x32xf32>
    %63 = arith.mulf %62, %7 : vector<16x32xf32>
    %64 = arith.addf %60, %63 : vector<16x32xf32>
    %c1_42 = arith.constant 1 : index
    %c4_43 = arith.constant 4 : index
    %65 = memref.load %arg1[%c1_42, %c4_43] : memref<2x8xf32, #tpu.memory_space<smem>>
    %66 = vector.broadcast %65 : f32 to vector<16x32xf32>
    %67 = arith.mulf %66, %9 : vector<16x32xf32>
    %68 = arith.addf %64, %67 : vector<16x32xf32>
    %c1_44 = arith.constant 1 : index
    %c5_45 = arith.constant 5 : index
    %69 = memref.load %arg1[%c1_44, %c5_45] : memref<2x8xf32, #tpu.memory_space<smem>>
    %70 = vector.broadcast %69 : f32 to vector<16x32xf32>
    %71 = arith.mulf %70, %11 : vector<16x32xf32>
    %72 = arith.addf %68, %71 : vector<16x32xf32>
    %c1_46 = arith.constant 1 : index
    %c6_47 = arith.constant 6 : index
    %73 = memref.load %arg1[%c1_46, %c6_47] : memref<2x8xf32, #tpu.memory_space<smem>>
    %74 = vector.broadcast %73 : f32 to vector<16x32xf32>
    %75 = arith.mulf %74, %13 : vector<16x32xf32>
    %76 = arith.addf %72, %75 : vector<16x32xf32>
    %c1_48 = arith.constant 1 : index
    %c7_49 = arith.constant 7 : index
    %77 = memref.load %arg1[%c1_48, %c7_49] : memref<2x8xf32, #tpu.memory_space<smem>>
    %78 = vector.broadcast %77 : f32 to vector<16x32xf32>
    %79 = arith.mulf %78, %15 : vector<16x32xf32>
    %80 = arith.addf %76, %79 : vector<16x32xf32>
    %81 = tpu.concatenate %48, %80 in 0 : vector<16x32xf32>, vector<16x32xf32> -> vector<32x32xf32>
    %82 = tpu.iota {dimensions = array<i32: 0>} : vector<32x1xi32>
    %c16_i32 = arith.constant 16 : i32
    %c0_i32 = arith.constant 0 : i32
    %83 = arith.cmpi eq, %c16_i32, %c0_i32 : i32
    %c1_i32 = arith.constant 1 : i32
    %84 = arith.select %83, %c1_i32, %c16_i32 : i32
    %85 = vector.broadcast %84 : i32 to vector<32x1xi32>
    %86 = arith.remsi %82, %85 : vector<32x1xi32>
    %c0_i32_50 = arith.constant 0 : i32
    %87 = vector.broadcast %c0_i32_50 : i32 to vector<32x1xi32>
    %88 = arith.cmpi ne, %86, %87 : vector<32x1xi32>
    %c0_i32_51 = arith.constant 0 : i32
    %89 = vector.broadcast %c0_i32_51 : i32 to vector<32x1xi32>
    %90 = arith.cmpi slt, %86, %89 : vector<32x1xi32>
    %c0_i32_52 = arith.constant 0 : i32
    %91 = arith.cmpi slt, %84, %c0_i32_52 : i32
    %92 = vector.broadcast %91 : i1 to vector<32x1xi1>
    %93 = vector.broadcast %92 : vector<32x1xi1> to vector<32x1xi1>
    %94 = arith.xori %90, %93 : vector<32x1xi1>
    %95 = arith.andi %94, %88 : vector<32x1xi1>
    %96 = vector.broadcast %84 : i32 to vector<32x1xi32>
    %97 = arith.addi %86, %96 : vector<32x1xi32>
    %98 = arith.select %95, %97, %86 : vector<32x1xi1>, vector<32x1xi32>
    %c0_i32_53 = arith.constant 0 : i32
    %99 = vector.broadcast %c0_i32_53 : i32 to vector<32x1xi32>
    %100 = arith.cmpi ne, %98, %99 : vector<32x1xi32>
    %101 = arith.extui %100 : vector<32x1xi1> to vector<32x1xi32>
    %102 = arith.sitofp %101 : vector<32x1xi32> to vector<32x1xf32>
    %c15_i32 = arith.constant 15 : i32
    %103 = vector.broadcast %c15_i32 : i32 to vector<32x1xi32>
    %104 = arith.cmpi ne, %98, %103 : vector<32x1xi32>
    %105 = arith.extui %104 : vector<32x1xi1> to vector<32x1xi32>
    %106 = arith.sitofp %105 : vector<32x1xi32> to vector<32x1xf32>
    %c1_i32_54 = arith.constant 1 : i32
    %107 = tpu.dynamic_rotate %81 by %c1_i32_54 dim 0 : vector<32x32xf32>, i32 -> vector<32x32xf32>
    %108 = vector.broadcast %102 : vector<32x1xf32> to vector<32x32xf32>
    %109 = arith.mulf %108, %107 : vector<32x32xf32>
    %c31_i32 = arith.constant 31 : i32
    %110 = tpu.dynamic_rotate %81 by %c31_i32 dim 0 : vector<32x32xf32>, i32 -> vector<32x32xf32>
    %111 = vector.broadcast %106 : vector<32x1xf32> to vector<32x32xf32>
    %112 = arith.mulf %111, %110 : vector<32x32xf32>
    %113 = tpu.concatenate %109, %81, %112 in 1 : vector<32x32xf32>, vector<32x32xf32>, vector<32x32xf32> -> vector<32x96xf32>
    %c0_55 = arith.constant 0 : index
    %c0_56 = arith.constant 0 : index
    %114 = vector.load %arg4[%c0_55, %c0_56] : memref<96x64xf32, #tpu.memory_space<vmem>>, vector<96x64xf32>
    %cst = arith.constant dense<0.000000e+00> : vector<32x64xf32>
    %115 = tpu.matmul %113, %114, %cst {dimension_numbers = #tpu.dot_dimension_numbers<[1], [0], [0], [1], [0, 0, 1, 1], [], []>} : vector<32x96xf32>, vector<96x64xf32>, vector<32x64xf32> -> vector<32x64xf32>
    %c0_57 = arith.constant 0 : index
    %c0_58 = arith.constant 0 : index
    %116 = vector.load %arg5[%c0_57, %c0_58] : memref<1x64xf32, #tpu.memory_space<vmem>>, vector<1x64xf32>
    %117 = vector.broadcast %116 : vector<1x64xf32> to vector<32x64xf32>
    %118 = arith.addf %115, %117 : vector<32x64xf32>
    %cst_59 = arith.constant 0.000000e+00 : f32
    %119 = vector.broadcast %cst_59 : f32 to vector<32x64xf32>
    %120 = arith.maximumf %118, %119 : vector<32x64xf32>
    %c1_i32_60 = arith.constant 1 : i32
    %121 = tpu.dynamic_rotate %120 by %c1_i32_60 dim 0 : vector<32x64xf32>, i32 -> vector<32x64xf32>
    %122 = vector.broadcast %102 : vector<32x1xf32> to vector<32x64xf32>
    %123 = arith.mulf %122, %121 : vector<32x64xf32>
    %c31_i32_61 = arith.constant 31 : i32
    %124 = tpu.dynamic_rotate %120 by %c31_i32_61 dim 0 : vector<32x64xf32>, i32 -> vector<32x64xf32>
    %125 = vector.broadcast %106 : vector<32x1xf32> to vector<32x64xf32>
    %126 = arith.mulf %125, %124 : vector<32x64xf32>
    %127 = tpu.concatenate %123, %120, %126 in 1 : vector<32x64xf32>, vector<32x64xf32>, vector<32x64xf32> -> vector<32x192xf32>
    %c0_62 = arith.constant 0 : index
    %c0_63 = arith.constant 0 : index
    %128 = vector.load %arg6[%c0_62, %c0_63] : memref<192x32xf32, #tpu.memory_space<vmem>>, vector<192x32xf32>
    %cst_64 = arith.constant dense<0.000000e+00> : vector<32x32xf32>
    %129 = tpu.matmul %127, %128, %cst_64 {dimension_numbers = #tpu.dot_dimension_numbers<[1], [0], [0], [1], [0, 0, 1, 1], [], []>} : vector<32x192xf32>, vector<192x32xf32>, vector<32x32xf32> -> vector<32x32xf32>
    %c0_65 = arith.constant 0 : index
    %c0_66 = arith.constant 0 : index
    %130 = vector.load %arg7[%c0_65, %c0_66] : memref<1x32xf32, #tpu.memory_space<vmem>>, vector<1x32xf32>
    %131 = vector.broadcast %130 : vector<1x32xf32> to vector<32x32xf32>
    %132 = arith.addf %129, %131 : vector<32x32xf32>
    %cst_67 = arith.constant 0.000000e+00 : f32
    %133 = vector.broadcast %cst_67 : f32 to vector<32x32xf32>
    %134 = arith.maximumf %132, %133 : vector<32x32xf32>
    %c1_i32_68 = arith.constant 1 : i32
    %135 = tpu.dynamic_rotate %134 by %c1_i32_68 dim 0 : vector<32x32xf32>, i32 -> vector<32x32xf32>
    %136 = vector.broadcast %102 : vector<32x1xf32> to vector<32x32xf32>
    %137 = arith.mulf %136, %135 : vector<32x32xf32>
    %c31_i32_69 = arith.constant 31 : i32
    %138 = tpu.dynamic_rotate %134 by %c31_i32_69 dim 0 : vector<32x32xf32>, i32 -> vector<32x32xf32>
    %139 = vector.broadcast %106 : vector<32x1xf32> to vector<32x32xf32>
    %140 = arith.mulf %139, %138 : vector<32x32xf32>
    %141 = tpu.concatenate %137, %134, %140 in 1 : vector<32x32xf32>, vector<32x32xf32>, vector<32x32xf32> -> vector<32x96xf32>
    %c0_70 = arith.constant 0 : index
    %c0_71 = arith.constant 0 : index
    %142 = vector.load %arg8[%c0_70, %c0_71] : memref<96x4xf32, #tpu.memory_space<vmem>>, vector<96x4xf32>
    %cst_72 = arith.constant dense<0.000000e+00> : vector<32x4xf32>
    %143 = tpu.matmul %141, %142, %cst_72 {dimension_numbers = #tpu.dot_dimension_numbers<[1], [0], [0], [1], [0, 0, 1, 1], [], []>} : vector<32x96xf32>, vector<96x4xf32>, vector<32x4xf32> -> vector<32x4xf32>
    %c0_73 = arith.constant 0 : index
    %c0_74 = arith.constant 0 : index
    %144 = vector.load %arg9[%c0_73, %c0_74] : memref<1x4xf32, #tpu.memory_space<vmem>>, vector<1x4xf32>
    %145 = vector.broadcast %144 : vector<1x4xf32> to vector<32x4xf32>
    %146 = arith.addf %143, %145 : vector<32x4xf32>
    %c0_75 = arith.constant 0 : index
    %c0_76 = arith.constant 0 : index
    %147 = vector.load %arg10[%c0_75, %c0_76] : memref<32x4xf32, #tpu.memory_space<vmem>>, vector<32x4xf32>
    tpu.vector_store %arg10[%c0_75, %c0_76], %146 {strides = array<i32>} : memref<32x4xf32, #tpu.memory_space<vmem>>, vector<32x4xf32>,
    return
  }
  func.func @transform_0(%arg0: i32) -> (i32, i32) {
    %c0_i32 = arith.constant 0 : i32
    %c0_i32_0 = arith.constant 0 : i32
    %c0_i32_1 = arith.constant 0 : i32
    return %c0_i32, %c0_i32_0 : i32, i32
  }
  func.func @transform_1(%arg0: i32) -> (i32, i32, i32) {
    %c0_i32 = arith.constant 0 : i32
    %c0_i32_0 = arith.constant 0 : i32
    %c0_i32_1 = arith.constant 0 : i32
    %c0_i32_2 = arith.constant 0 : i32
    return %c0_i32, %c0_i32_0, %c0_i32_1 : i32, i32, i32
  }
  func.func @transform_2(%arg0: i32) -> (i32, i32) {
    %c0_i32 = arith.constant 0 : i32
    %c0_i32_0 = arith.constant 0 : i32
    %c0_i32_1 = arith.constant 0 : i32
    return %c0_i32, %c0_i32_0 : i32, i32
  }
  func.func @transform_3(%arg0: i32) -> (i32, i32) {
    %c0_i32 = arith.constant 0 : i32
    %c0_i32_0 = arith.constant 0 : i32
    %c0_i32_1 = arith.constant 0 : i32
    return %c0_i32, %c0_i32_0 : i32, i32
  }
  func.func @transform_4(%arg0: i32) -> (i32, i32) {
    %c0_i32 = arith.constant 0 : i32
    %c0_i32_0 = arith.constant 0 : i32
    %c0_i32_1 = arith.constant 0 : i32
    return %c0_i32, %c0_i32_0 : i32, i32
  }
  func.func @transform_5(%arg0: i32) -> (i32, i32) {
    %c0_i32 = arith.constant 0 : i32
    %c0_i32_0 = arith.constant 0 : i32
    %c0_i32_1 = arith.constant 0 : i32
    return %c0_i32, %c0_i32_0 : i32, i32
  }
  func.func @transform_6(%arg0: i32) -> (i32, i32) {
    %c0_i32 = arith.constant 0 : i32
    %c0_i32_0 = arith.constant 0 : i32
    %c0_i32_1 = arith.constant 0 : i32
    return %c0_i32, %c0_i32_0 : i32, i32
  }
  func.func @transform_7(%arg0: i32) -> (i32, i32) {
    %c0_i32 = arith.constant 0 : i32
    %c0_i32_0 = arith.constant 0 : i32
    %c0_i32_1 = arith.constant 0 : i32
    return %c0_i32, %c0_i32_0 : i32, i32
  }
  func.func @transform_8(%arg0: i32) -> (i32, i32) {
    %c0_i32 = arith.constant 0 : i32
    %c0_i32_0 = arith.constant 0 : i32
    %c0_i32_1 = arith.constant 0 : i32
    return %c0_i32, %c0_i32_0 : i32, i32
  }
  func.func @transform_9(%arg0: i32) -> (i32, i32) {
    %c0_i32 = arith.constant 0 : i32
    %c0_i32_0 = arith.constant 0 : i32
    %c0_i32_1 = arith.constant 0 : i32
    return %c0_i32, %c0_i32_0 : i32, i32
  }
}

</mosaic_0001>

<llo_original>
// kernel: conv1d_decoder_forward.1
$region0: #{conv1d_decoder_forward.1}
  #allocation0 [shape = 'u32[]', space=smem, size = 0x4, offset = 0x4, fixed_abs, tag = 'smem constant byte address 0x4 - core index']
  #allocation1 [shape = 'u32[144,128]{1,0:T(1,128)}', space=vmem, size = 0x12000, scoped, tag = 'internal scratch']
  %s0 = inlined_call_operand.vmem [shape: f32[2,8], index: 0, kind: input, shape index: {}]
  %s1 = inlined_call_operand.vmem [shape: f32[8,16,32], index: 1, kind: input, shape index: {}]
  %s2 = inlined_call_operand.vmem [shape: f32[16,32], index: 2, kind: input, shape index: {}]
  %s3 = inlined_call_operand.vmem [shape: f32[96,64], index: 3, kind: input, shape index: {}]
  %s4 = inlined_call_operand.vmem [shape: f32[1,64], index: 4, kind: input, shape index: {}]
  %s5 = inlined_call_operand.vmem [shape: f32[192,32], index: 5, kind: input, shape index: {}]
  %s6 = inlined_call_operand.vmem [shape: f32[1,32], index: 6, kind: input, shape index: {}]
  %s7 = inlined_call_operand.vmem [shape: f32[96,4], index: 7, kind: input, shape index: {}]
  %s8 = inlined_call_operand.vmem [shape: f32[1,4], index: 8, kind: input, shape index: {}]
  %s9 = inlined_call_operand.vmem [shape: f32[32,4], index: 9, kind: output, shape index: {}]
  %s10 = sld [smem:[#allocation0]]
  $region50: #{conv1d_decoder_forward.1} parent=0
    _
  %s12 = ssub.s32 1, %s10
  %s13 = scalar_select 0, %s12, %s10
  $region1: #{conv1d_decoder_forward.1} parent=0
    #allocation2 [shape = 'u8[1024]{0}', space=smem, size = 0x400, scoped, tag = 'input window, operand 0, single buffered']
    #allocation3 [shape = 's32[1]{0}', space=sflag, size = 0x4, scoped, tag = 'scoped memory for conv1d_decoder_forward.1']
    %14 = vsyncpa [#allocation3], 0
    // Predicated region
    $region2: #{conv1d_decoder_forward.1} parent=1 // pred_check
      _
    $region3: #{conv1d_decoder_forward.1} parent=1 // pred_check_branch
      %16 = sbr.rel (0) target = $region5
    $region4: #{conv1d_decoder_forward.1} parent=1 // pred_region
      %s18 = ssub.s32 32, 32
      %19 = vsyncadd [#allocation3], %s18
      %s21 = sshll.u32 %s0, 4
      %s22 = int_to_ptr.vmem [resolvable:$true] %s21
      %24 = dma.vmem_to_smem %s22, 32, [#allocation2], [#allocation3]
    $region5: #{conv1d_decoder_forward.1} parent=1 // pred_fallthru
      _
    // Predicated region
    $region6: #{conv1d_decoder_forward.1} parent=1 // pred_check
      _
    $region7: #{conv1d_decoder_forward.1} parent=1 // pred_check_branch
      %26 = sbr.rel (0) target = $region9
    $region8: #{conv1d_decoder_forward.1} parent=1 // pred_region
      _
    $region9: #{conv1d_decoder_forward.1} parent=1 // pred_fallthru
      _
    // Predicated region
    $region10: #{conv1d_decoder_forward.1} parent=1 // pred_check
      _
    $region11: #{conv1d_decoder_forward.1} parent=1 // pred_check_branch
      %28 = sbr.rel (0) target = $region13
    $region12: #{conv1d_decoder_forward.1} parent=1 // pred_region
      _
    $region13: #{conv1d_decoder_forward.1} parent=1 // pred_fallthru
      _
    // Predicated region
    $region14: #{conv1d_decoder_forward.1} parent=1 // pred_check
      _
    $region15: #{conv1d_decoder_forward.1} parent=1 // pred_check_branch
      %30 = sbr.rel (0) target = $region17
    $region16: #{conv1d_decoder_forward.1} parent=1 // pred_region
      _
    $region17: #{conv1d_decoder_forward.1} parent=1 // pred_fallthru
      _
    // Predicated region
    $region18: #{conv1d_decoder_forward.1} parent=1 // pred_check
      _
    $region19: #{conv1d_decoder_forward.1} parent=1 // pred_check_branch
      %32 = sbr.rel (0) target = $region21
    $region20: #{conv1d_decoder_forward.1} parent=1 // pred_region
      _
    $region21: #{conv1d_decoder_forward.1} parent=1 // pred_fallthru
      _
    // Predicated region
    $region22: #{conv1d_decoder_forward.1} parent=1 // pred_check
      _
    $region23: #{conv1d_decoder_forward.1} parent=1 // pred_check_branch
      %34 = sbr.rel (0) target = $region25
    $region24: #{conv1d_decoder_forward.1} parent=1 // pred_region
      _
    $region25: #{conv1d_decoder_forward.1} parent=1 // pred_fallthru
      _
    // Predicated region
    $region26: #{conv1d_decoder_forward.1} parent=1 // pred_check
      _
    $region27: #{conv1d_decoder_forward.1} parent=1 // pred_check_branch
      %36 = sbr.rel (0) target = $region29
    $region28: #{conv1d_decoder_forward.1} parent=1 // pred_region
      _
    $region29: #{conv1d_decoder_forward.1} parent=1 // pred_fallthru
      _
    // Predicated region
    $region30: #{conv1d_decoder_forward.1} parent=1 // pred_check
      _
    $region31: #{conv1d_decoder_forward.1} parent=1 // pred_check_branch
      %38 = sbr.rel (0) target = $region33
    $region32: #{conv1d_decoder_forward.1} parent=1 // pred_region
      _
    $region33: #{conv1d_decoder_forward.1} parent=1 // pred_fallthru
      _
    // Predicated region
    $region34: #{conv1d_decoder_forward.1} parent=1 // pred_check
      _
    $region35: #{conv1d_decoder_forward.1} parent=1 // pred_check_branch
      %40 = sbr.rel (0) target = $region37
    $region36: #{conv1d_decoder_forward.1} parent=1 // pred_region
      _
    $region37: #{conv1d_decoder_forward.1} parent=1 // pred_fallthru
      _
    // Predicated region
    $region38: #{conv1d_decoder_forward.1} parent=1 // pred_check
      _
    $region39: #{conv1d_decoder_forward.1} parent=1 // pred_check_branch
      %42 = sbr.rel (0) target = $region41
    $region40: #{conv1d_decoder_forward.1} parent=1 // pred_region
      %43 = dma.done [#allocation3], 32
    $region41: #{conv1d_decoder_forward.1} parent=1 // pred_fallthru
      _
    %44 = sfence
    %v45 = vld [vmem:[%s1] sm:$0xff]
    %v46 = vld [vmem:[%s1 + $0x8] sm:$0xff]
    %s47 = scalar_lea.vmem %s1, 16
    %v48 = vld [vmem:[%s47] sm:$0xff]
    %v49 = vld [vmem:[%s47 + $0x8] sm:$0xff]
    %s50 = scalar_lea.vmem %s1, 32
    %v51 = vld [vmem:[%s50] sm:$0xff]
    %v52 = vld [vmem:[%s50 + $0x8] sm:$0xff]
    %s53 = scalar_lea.vmem %s1, 48
    %v54 = vld [vmem:[%s53] sm:$0xff]
    %v55 = vld [vmem:[%s53 + $0x8] sm:$0xff]
    %s56 = scalar_lea.vmem %s1, 64
    %v57 = vld [vmem:[%s56] sm:$0xff]
    %v58 = vld [vmem:[%s56 + $0x8] sm:$0xff]
    %s59 = scalar_lea.vmem %s1, 80
    %v60 = vld [vmem:[%s59] sm:$0xff]
    %v61 = vld [vmem:[%s59 + $0x8] sm:$0xff]
    %s62 = scalar_lea.vmem %s1, 96
    %v63 = vld [vmem:[%s62] sm:$0xff]
    %v64 = vld [vmem:[%s62 + $0x8] sm:$0xff]
    %s65 = scalar_lea.vmem %s1, 112
    %v66 = vld [vmem:[%s65] sm:$0xff]
    %v67 = vld [vmem:[%s65 + $0x8] sm:$0xff]
    %v68 = vld [vmem:[%s2] sm:$0xff]
    %v69 = vld [vmem:[%s2 + $0x8] sm:$0xff]
    %s70 = sld [smem:[#allocation2]]
    %v71 = vstv %s70
    %v72 = vmul.f32 %v71, %v45
    %v73 = vmul.f32 %v71, %v46
    %v74 = vadd.f32 %v68, %v72
    %v75 = vadd.f32 %v69, %v73
    %s76 = sld [smem:[#allocation2 + $0x1]]
    %v77 = vstv %s76
    %v78 = vmul.f32 %v77, %v48
    %v79 = vmul.f32 %v77, %v49
    %v80 = vadd.f32 %v74, %v78
    %v81 = vadd.f32 %v75, %v79
    %s82 = sld [smem:[#allocation2 + $0x2]]
    %v83 = vstv %s82
    %v84 = vmul.f32 %v83, %v51
    %v85 = vmul.f32 %v83, %v52
    %v86 = vadd.f32 %v80, %v84
    %v87 = vadd.f32 %v81, %v85
    %s88 = sld [smem:[#allocation2 + $0x3]]
    %v89 = vstv %s88
    %v90 = vmul.f32 %v89, %v54
    %v91 = vmul.f32 %v89, %v55
    %v92 = vadd.f32 %v86, %v90
    %v93 = vadd.f32 %v87, %v91
    %s94 = sld [smem:[#allocation2 + $0x4]]
    %v95 = vstv %s94
    %v96 = vmul.f32 %v95, %v57
    %v97 = vmul.f32 %v95, %v58
    %v98 = vadd.f32 %v92, %v96
    %v99 = vadd.f32 %v93, %v97
    %s100 = sld [smem:[#allocation2 + $0x5]]
    %v101 = vstv %s100
    %v102 = vmul.f32 %v101, %v60
    %v103 = vmul.f32 %v101, %v61
    %v104 = vadd.f32 %v98, %v102
    %v105 = vadd.f32 %v99, %v103
    %s106 = sld [smem:[#allocation2 + $0x6]]
    %v107 = vstv %s106
    %v108 = vmul.f32 %v107, %v63
    %v109 = vmul.f32 %v107, %v64
    %v110 = vadd.f32 %v104, %v108
    %v111 = vadd.f32 %v105, %v109
    %s112 = sld [smem:[#allocation2 + $0x7]]
    %v113 = vstv %s112
    %v114 = vmul.f32 %v113, %v66
    %v115 = vmul.f32 %v113, %v67
    %v116 = vadd.f32 %v110, %v114
    %v117 = vadd.f32 %v111, %v115
    %s118 = sld [smem:[#allocation2 + $0x80]]
    %v119 = vstv %s118
    %v120 = vmul.f32 %v119, %v45
    %v121 = vmul.f32 %v119, %v46
    %v122 = vadd.f32 %v68, %v120
    %v123 = vadd.f32 %v69, %v121
    %s124 = sld [smem:[#allocation2 + $0x81]]
    %v125 = vstv %s124
    %v126 = vmul.f32 %v125, %v48
    %v127 = vmul.f32 %v125, %v49
    %v128 = vadd.f32 %v122, %v126
    %v129 = vadd.f32 %v123, %v127
    %s130 = sld [smem:[#allocation2 + $0x82]]
    %v131 = vstv %s130
    %v132 = vmul.f32 %v131, %v51
    %v133 = vmul.f32 %v131, %v52
    %v134 = vadd.f32 %v128, %v132
    %v135 = vadd.f32 %v129, %v133
    %s136 = sld [smem:[#allocation2 + $0x83]]
    %v137 = vstv %s136
    %v138 = vmul.f32 %v137, %v54
    %v139 = vmul.f32 %v137, %v55
    %v140 = vadd.f32 %v134, %v138
    %v141 = vadd.f32 %v135, %v139
    %s142 = sld [smem:[#allocation2 + $0x84]]
    %v143 = vstv %s142
    %v144 = vmul.f32 %v143, %v57
    %v145 = vmul.f32 %v143, %v58
    %v146 = vadd.f32 %v140, %v144
    %v147 = vadd.f32 %v141, %v145
    %s148 = sld [smem:[#allocation2 + $0x85]]
    %v149 = vstv %s148
    %v150 = vmul.f32 %v149, %v60
    %v151 = vmul.f32 %v149, %v61
    %v152 = vadd.f32 %v146, %v150
    %v153 = vadd.f32 %v147, %v151
    %s154 = sld [smem:[#allocation2 + $0x86]]
    %v155 = vstv %s154
    %v156 = vmul.f32 %v155, %v63
    %v157 = vmul.f32 %v155, %v64
    %v158 = vadd.f32 %v152, %v156
    %v159 = vadd.f32 %v153, %v157
    %s160 = sld [smem:[#allocation2 + $0x87]]
    %v161 = vstv %s160
    %v162 = vmul.f32 %v161, %v66
    %v163 = vmul.f32 %v161, %v67
    %v164 = vadd.f32 %v158, %v162
    %v165 = vadd.f32 %v159, %v163
    %v166 = vlaneseq
    %v167 = vshrl.u32 %v166, 7
    %v168 = vadd.s32 %v167, 8
    %v169 = vadd.s32 %v167, 16
    %v170 = vadd.s32 %v167, 24
    %vm171 = vcmp.lt.s32.totalorder %v167, 0
    %v172 = vsub.s32 0, %v167
    %v173 = vsel %vm171, %v172, %v167
    %v174 = vshrl.u32 %v173, 4
    %v175 = vand.u32 %v173, 15
    %v176 = vsub.s32 0, %v175
    %v177 = vsel %vm171, %v176, %v175
    %vm178 = vcmp.lt.s32.totalorder %v168, 0
    %v179 = vsub.s32 0, %v168
    %v180 = vsel %vm178, %v179, %v168
    %v181 = vshrl.u32 %v180, 4
    %v182 = vand.u32 %v180, 15
    %v183 = vsub.s32 0, %v182
    %v184 = vsel %vm178, %v183, %v182
    %vm185 = vcmp.lt.s32.totalorder %v169, 0
    %v186 = vsub.s32 0, %v169
    %v187 = vsel %vm185, %v186, %v169
    %v188 = vshrl.u32 %v187, 4
    %v189 = vand.u32 %v187, 15
    %v190 = vsub.s32 0, %v189
    %v191 = vsel %vm185, %v190, %v189
    %vm192 = vcmp.lt.s32.totalorder %v170, 0
    %v193 = vsub.s32 0, %v170
    %v194 = vsel %vm192, %v193, %v170
    %v195 = vshrl.u32 %v194, 4
    %v196 = vand.u32 %v194, 15
    %v197 = vsub.s32 0, %v196
    %v198 = vsel %vm192, %v197, %v196
    %vm199 = vcmp.ne.s32.totalorder %v177, 0
    %vm200 = vcmp.ne.s32.totalorder %v184, 0
    %vm201 = vcmp.ne.s32.totalorder %v191, 0
    %vm202 = vcmp.ne.s32.totalorder %v198, 0
    %vm203 = vcmp.lt.s32.totalorder %v177, 0
    %vm204 = vcmp.lt.s32.totalorder %v184, 0
    %vm205 = vcmp.lt.s32.totalorder %v191, 0
    %vm206 = vcmp.lt.s32.totalorder %v198, 0
    %vm207 = vmand %vm203, %vm199
    %vm208 = vmand %vm204, %vm200
    %vm209 = vmand %vm205, %vm201
    %vm210 = vmand %vm206, %vm202
    %v211 = vadd.s32 %v177, 16
    %v212 = vadd.s32 %v184, 16
    %v213 = vadd.s32 %v191, 16
    %v214 = vadd.s32 %v198, 16
    %v215 = vsel %vm207, %v211, %v177
    %v216 = vsel %vm208, %v212, %v184
    %v217 = vsel %vm209, %v213, %v191
    %v218 = vsel %vm210, %v214, %v198
    %vm219 = vcmp.ne.s32.totalorder %v215, 0
    %vm220 = vcmp.ne.s32.totalorder %v216, 0
    %vm221 = vcmp.ne.s32.totalorder %v217, 0
    %vm222 = vcmp.ne.s32.totalorder %v218, 0
    %v223 = vsel %vm219, 1, 0
    %v224 = vsel %vm220, 1, 0
    %v225 = vsel %vm221, 1, 0
    %v226 = vsel %vm222, 1, 0
    %v227 = vcvt.s32.f32 %v223
    %v228 = vcvt.s32.f32 %v224
    %v229 = vcvt.s32.f32 %v225
    %v230 = vcvt.s32.f32 %v226
    %vm231 = vcmp.ne.s32.totalorder %v215, 15
    %vm232 = vcmp.ne.s32.totalorder %v216, 15
    %vm233 = vcmp.ne.s32.totalorder %v217, 15
    %vm234 = vcmp.ne.s32.totalorder %v218, 15
    %v235 = vsel %vm231, 1, 0
    %v236 = vsel %vm232, 1, 0
    %v237 = vsel %vm233, 1, 0
    %v238 = vsel %vm234, 1, 0
    %v239 = vcvt.s32.f32 %v235
    %v240 = vcvt.s32.f32 %v236
    %v241 = vcvt.s32.f32 %v237
    %v242 = vcvt.s32.f32 %v238
    %v243 = vrot.slane %v116, 7
    %v244 = vrot.slane %v117, 7
    %v245 = vrot.slane %v164, 7
    %v246 = vrot.slane %v165, 7
    %vm247 = vcmp.lt.s32.totalorder %v167, 1
    %v248 = vsel %vm247, %v245, %v246
    %v249 = vsel %vm247, %v244, %v245
    %v250 = vsel %vm247, %v243, %v244
    %v251 = vsel %vm247, %v246, %v243
    %v252 = vmul.f32 %v227, %v251
    %v253 = vmul.f32 %v228, %v250
    %v254 = vmul.f32 %v229, %v249
    %v255 = vmul.f32 %v230, %v248
    %v256 = vrot.slane %v116, 1
    %v257 = vrot.slane %v117, 1
    %v258 = vrot.slane %v164, 1
    %v259 = vrot.slane %v165, 1
    %vm260 = vcmp.lt.s32.totalorder %v167, 7
    %v261 = vsel %vm260, %v258, %v259
    %v262 = vsel %vm260, %v257, %v258
    %v263 = vsel %vm260, %v256, %v257
    %v264 = vsel %vm260, %v259, %v256
    %v265 = vmul.f32 %v239, %v263
    %v266 = vmul.f32 %v240, %v262
    %v267 = vmul.f32 %v241, %v261
    %v268 = vmul.f32 %v242, %v264
    %273 = vrot.lane.b32.xlu0 %v116, 32
    %v274 = vpop.permute.xlu0 %273
    %275 = vrot.lane.b32.xlu0 %v117, 32
    %v276 = vpop.permute.xlu0 %275
    %277 = vrot.lane.b32.xlu0 %v164, 32
    %v278 = vpop.permute.xlu0 %277
    %279 = vrot.lane.b32.xlu0 %v165, 32
    %v280 = vpop.permute.xlu0 %279
    %289 = vrot.lane.b32.xlu0 %v265, 64
    %v290 = vpop.permute.xlu0 %289
    %291 = vrot.lane.b32.xlu0 %v266, 64
    %v292 = vpop.permute.xlu0 %291
    %293 = vrot.lane.b32.xlu0 %v267, 64
    %v294 = vpop.permute.xlu0 %293
    %295 = vrot.lane.b32.xlu0 %v268, 64
    %v296 = vpop.permute.xlu0 %295
    %vm301 = vcmask 261120
    %v302 = vsel %vm301, %v252, %v274
    %v303 = vsel %vm301, %v253, %v276
    %v304 = vsel %vm301, %v254, %v278
    %v305 = vsel %vm301, %v255, %v280
    %vm306 = vcmask 523264
    %v307 = vsel %vm306, %v302, %v290
    %v308 = vsel %vm306, %v303, %v292
    %v309 = vsel %vm306, %v304, %v294
    %v310 = vsel %vm306, %v305, %v296
    %v311 = vld [vmem:[%s3] sm:$0xff]
    %v312 = vld [vmem:[%s3 + $0x8] sm:$0xff]
    %v313 = vld [vmem:[%s3 + $0x10] sm:$0xff]
    %v314 = vld [vmem:[%s3 + $0x18] sm:$0xff]
    %v315 = vld [vmem:[%s3 + $0x20] sm:$0xff]
    %v316 = vld [vmem:[%s3 + $0x28] sm:$0xff]
    %v317 = vld [vmem:[%s3 + $0x30] sm:$0xff]
    %v318 = vld [vmem:[%s3 + $0x38] sm:$0xff]
    %v319 = vld [vmem:[%s3 + $0x40] sm:$0xff]
    %v320 = vld [vmem:[%s3 + $0x48] sm:$0xff]
    %v321 = vld [vmem:[%s3 + $0x50] sm:$0xff]
    %v322 = vld [vmem:[%s3 + $0x58] sm:$0xff]
    %v323 = vld [vmem:[%s4] sm:$0x1]
    %v325 = vlaneseq
    %v326 = vshrl.u32 %v325, 7
    %v327 = vsub.s32 0, %v326
    %v328 = vrot.slane %v323, %v327
    %vm330 = vcmask 785408
    %v332 = vsel %vm330, %v307, 0
    %v335 = vsel %vm330, %v308, 0
    %v338 = vsel %vm330, %v309, 0
    %v341 = vsel %vm330, %v310, 0
    %343 = vmatprep.subr.mxu0 0.0
    %344 = vmatpush1.msra.mxu0 %v311
    %345 = vmatprep.subr.mxu0 0.0
    %346 = vmatpush1.msra.mxu0 %v312
    %347 = vmatprep.subr.mxu0 0.0
    %348 = vmatpush1.msra.mxu0 %v313
    %349 = vmatprep.subr.mxu0 0.0
    %350 = vmatpush1.msra.mxu0 %v314
    %351 = vmatprep.subr.mxu0 0.0
    %352 = vmatpush1.msra.mxu0 %v315
    %353 = vmatprep.subr.mxu0 0.0
    %354 = vmatpush1.msra.mxu0 %v316
    %355 = vmatprep.subr.mxu0 0.0
    %356 = vmatpush1.msra.mxu0 %v317
    %357 = vmatprep.subr.mxu0 0.0
    %358 = vmatpush1.msra.mxu0 %v318
    %359 = vmatprep.subr.mxu0 0.0
    %360 = vmatpush1.msra.mxu0 %v319
    %361 = vmatprep.subr.mxu0 0.0
    %362 = vmatpush1.msra.mxu0 %v320
    %363 = vmatprep.subr.mxu0 0.0
    %364 = vmatpush1.msra.mxu0 %v321
    %365 = vmatprep.subr.mxu0 0.0
    %366 = vmatpush1.msra.mxu0 %v322
    %367 = vmatprep.subr.mxu0 0.0
    %368 = vmatpush1.msra.mxu0 0.0
    %369 = vmatprep.subr.mxu0 0.0
    %370 = vmatpush1.msra.mxu0 0.0
    %371 = vmatprep.subr.mxu0 0.0
    %372 = vmatpush1.msra.mxu0 0.0
    %373 = vmatprep.subr.mxu0 0.0
    %374 = vmatpush1.msra.mxu0 0.0
    %375 = vmatprep.subr.mxu0 0.0
    %376 = vmatpush1.msra.mxu0 0.0
    %377 = vmatprep.subr.mxu0 0.0
    %378 = vmatpush1.msra.mxu0 0.0
    %379 = vmatprep.subr.mxu0 0.0
    %380 = vmatpush1.msra.mxu0 0.0
    %381 = vmatprep.subr.mxu0 0.0
    %382 = vmatpush1.msra.mxu0 0.0
    %383 = vmatprep.subr.mxu0 0.0
    %384 = vmatpush1.msra.mxu0 0.0
    %385 = vmatprep.subr.mxu0 0.0
    %386 = vmatpush1.msra.mxu0 0.0
    %387 = vmatprep.subr.mxu0 0.0
    %388 = vmatpush1.msra.mxu0 0.0
    %389 = vmatprep.subr.mxu0 0.0
    %390 = vmatpush1.msra.mxu0 0.0
    %391 = vmatprep.subr.mxu0 0.0
    %392 = vmatpush1.msra.mxu0 0.0
    %393 = vmatprep.subr.mxu0 0.0
    %394 = vmatpush1.msra.mxu0 0.0
    %395 = vmatprep.subr.mxu0 0.0
    %396 = vmatpush1.msra.mxu0 0.0
    %397 = vmatprep.subr.mxu0 0.0
    %398 = vmatpush1.msra.mxu0 0.0
    %399 = vmatprep.subr.mxu0 0.0
    %400 = vmatpush1.msra.mxu0 0.0
    %401 = vmatprep.subr.mxu0 0.0
    %402 = vmatpush1.msra.mxu0 0.0
    %403 = vmatprep.subr.mxu0 0.0
    %404 = vmatpush1.msra.mxu0 0.0
    %405 = vmatprep.subr.mxu0 0.0
    %406 = vmatpush1.msra.mxu0 0.0
    %407 = vmatprep.mubr.f32.mxu0 0.0
    %408 = vmatmul.mubr.f32.gmra.mrb[0].mxu0 %v332
    %v409 = vpop.f32.mrb[0].mxu0
    %v410 = vadd.f32 %v328, %v409
    %v411 = vpop.f32.mrb[0].mxu0
    %412 = vmatprep.mubr.f32.mxu0 0.0
    %413 = vmatmul.mubr.f32.gmra.mrb[0].mxu0 %v335
    %v414 = vpop.f32.mrb[0].mxu0
    %v415 = vadd.f32 %v328, %v414
    %v416 = vpop.f32.mrb[0].mxu0
    %417 = vmatprep.mubr.f32.mxu0 0.0
    %418 = vmatmul.mubr.f32.gmra.mrb[0].mxu0 %v338
    %v419 = vpop.f32.mrb[0].mxu0
    %v420 = vadd.f32 %v328, %v419
    %v421 = vpop.f32.mrb[0].mxu0
    %422 = vmatprep.mubr.f32.mxu0 0.0
    %423 = vmatmul.mubr.f32.gmra.mrb[0].mxu0 %v341
    %v424 = vpop.f32.mrb[0].mxu0
    %v425 = vadd.f32 %v328, %v424
    %v426 = vpop.f32.mrb[0].mxu0
    %427 = vdwg.mxu0
    %v428 = vmax.f32 %v410, 0.0
    %v429 = vmax.f32 %v415, 0.0
    %v430 = vmax.f32 %v420, 0.0
    %v431 = vmax.f32 %v425, 0.0
    %v432 = vrot.slane %v428, 7
    %v433 = vrot.slane %v429, 7
    %v434 = vrot.slane %v430, 7
    %v435 = vrot.slane %v431, 7
    %v436 = vsel %vm247, %v434, %v435
    %v437 = vsel %vm247, %v433, %v434
    %v438 = vsel %vm247, %v432, %v433
    %v439 = vsel %vm247, %v435, %v432
    %v440 = vmul.f32 %v227, %v439
    %v441 = vmul.f32 %v228, %v438
    %v442 = vmul.f32 %v229, %v437
    %v443 = vmul.f32 %v230, %v436
    %v444 = vrot.slane %v428, 1
    %v445 = vrot.slane %v429, 1
    %v446 = vrot.slane %v430, 1
    %v447 = vrot.slane %v431, 1
    %v448 = vsel %vm260, %v446, %v447
    %v449 = vsel %vm260, %v445, %v446
    %v450 = vsel %vm260, %v444, %v445
    %v451 = vsel %vm260, %v447, %v444
    %v452 = vmul.f32 %v239, %v450
    %v453 = vmul.f32 %v240, %v449
    %v454 = vmul.f32 %v241, %v448
    %v455 = vmul.f32 %v242, %v451
    %460 = vrot.lane.b32.xlu0 %v428, 64
    %v461 = vpop.permute.xlu0 %460
    %462 = vrot.lane.b32.xlu0 %v429, 64
    %v463 = vpop.permute.xlu0 %462
    %464 = vrot.lane.b32.xlu0 %v430, 64
    %v465 = vpop.permute.xlu0 %464
    %466 = vrot.lane.b32.xlu0 %v431, 64
    %v467 = vpop.permute.xlu0 %466
    %v472 = vsel %vm306, %v440, %v461
    %v473 = vsel %vm306, %v441, %v463
    %v474 = vsel %vm306, %v442, %v465
    %v475 = vsel %vm306, %v443, %v467
    %v476 = vld [vmem:[%s5] sm:$0xff]
    %v477 = vld [vmem:[%s5 + $0x8] sm:$0xff]
    %v478 = vld [vmem:[%s5 + $0x10] sm:$0xff]
    %v479 = vld [vmem:[%s5 + $0x18] sm:$0xff]
    %v480 = vld [vmem:[%s5 + $0x20] sm:$0xff]
    %v481 = vld [vmem:[%s5 + $0x28] sm:$0xff]
    %v482 = vld [vmem:[%s5 + $0x30] sm:$0xff]
    %v483 = vld [vmem:[%s5 + $0x38] sm:$0xff]
    %v484 = vld [vmem:[%s5 + $0x40] sm:$0xff]
    %v485 = vld [vmem:[%s5 + $0x48] sm:$0xff]
    %v486 = vld [vmem:[%s5 + $0x50] sm:$0xff]
    %v487 = vld [vmem:[%s5 + $0x58] sm:$0xff]
    %v488 = vld [vmem:[%s5 + $0x60] sm:$0xff]
    %v489 = vld [vmem:[%s5 + $0x68] sm:$0xff]
    %v490 = vld [vmem:[%s5 + $0x70] sm:$0xff]
    %v491 = vld [vmem:[%s5 + $0x78] sm:$0xff]
    %v492 = vld [vmem:[%s5 + $0x80] sm:$0xff]
    %v493 = vld [vmem:[%s5 + $0x88] sm:$0xff]
    %v494 = vld [vmem:[%s5 + $0x90] sm:$0xff]
    %v495 = vld [vmem:[%s5 + $0x98] sm:$0xff]
    %v496 = vld [vmem:[%s5 + $0xa0] sm:$0xff]
    %v497 = vld [vmem:[%s5 + $0xa8] sm:$0xff]
    %v498 = vld [vmem:[%s5 + $0xb0] sm:$0xff]
    %v499 = vld [vmem:[%s5 + $0xb8] sm:$0xff]
    %v500 = vld [vmem:[%s6] sm:$0x1]
    %v502 = vlaneseq
    %v503 = vshrl.u32 %v502, 7
    %v504 = vsub.s32 0, %v503
    %v505 = vrot.slane %v500, %v504
    %v508 = vsel %vm306, %v452, 0
    %v511 = vsel %vm306, %v453, 0
    %v514 = vsel %vm306, %v454, 0
    %v517 = vsel %vm306, %v455, 0
    %519 = vmatprep.subr.mxu0 0.0
    %520 = vmatpush1.msra.mxu0 %v476
    %521 = vmatprep.subr.mxu0 0.0
    %522 = vmatpush1.msra.mxu0 %v477
    %523 = vmatprep.subr.mxu0 0.0
    %524 = vmatpush1.msra.mxu0 %v478
    %525 = vmatprep.subr.mxu0 0.0
    %526 = vmatpush1.msra.mxu0 %v479
    %527 = vmatprep.subr.mxu0 0.0
    %528 = vmatpush1.msra.mxu0 %v480
    %529 = vmatprep.subr.mxu0 0.0
    %530 = vmatpush1.msra.mxu0 %v481
    %531 = vmatprep.subr.mxu0 0.0
    %532 = vmatpush1.msra.mxu0 %v482
    %533 = vmatprep.subr.mxu0 0.0
    %534 = vmatpush1.msra.mxu0 %v483
    %535 = vmatprep.subr.mxu0 0.0
    %536 = vmatpush1.msra.mxu0 %v484
    %537 = vmatprep.subr.mxu0 0.0
    %538 = vmatpush1.msra.mxu0 %v485
    %539 = vmatprep.subr.mxu0 0.0
    %540 = vmatpush1.msra.mxu0 %v486
    %541 = vmatprep.subr.mxu0 0.0
    %542 = vmatpush1.msra.mxu0 %v487
    %543 = vmatprep.subr.mxu0 0.0
    %544 = vmatpush1.msra.mxu0 %v488
    %545 = vmatprep.subr.mxu0 0.0
    %546 = vmatpush1.msra.mxu0 %v489
    %547 = vmatprep.subr.mxu0 0.0
    %548 = vmatpush1.msra.mxu0 %v490
    %549 = vmatprep.subr.mxu0 0.0
    %550 = vmatpush1.msra.mxu0 %v491
    %551 = vmatprep.subr.mxu0 0.0
    %552 = vmatpush1.msra.mxu0 %v492
    %553 = vmatprep.subr.mxu0 0.0
    %554 = vmatpush1.msra.mxu0 %v493
    %555 = vmatprep.subr.mxu0 0.0
    %556 = vmatpush1.msra.mxu0 %v494
    %557 = vmatprep.subr.mxu0 0.0
    %558 = vmatpush1.msra.mxu0 %v495
    %559 = vmatprep.subr.mxu0 0.0
    %560 = vmatpush1.msra.mxu0 %v496
    %561 = vmatprep.subr.mxu0 0.0
    %562 = vmatpush1.msra.mxu0 %v497
    %563 = vmatprep.subr.mxu0 0.0
    %564 = vmatpush1.msra.mxu0 %v498
    %565 = vmatprep.subr.mxu0 0.0
    %566 = vmatpush1.msra.mxu0 %v499
    %567 = vmatprep.subr.mxu0 0.0
    %568 = vmatpush1.msra.mxu0 0.0
    %569 = vmatprep.subr.mxu0 0.0
    %570 = vmatpush1.msra.mxu0 0.0
    %571 = vmatprep.subr.mxu0 0.0
    %572 = vmatpush1.msra.mxu0 0.0
    %573 = vmatprep.subr.mxu0 0.0
    %574 = vmatpush1.msra.mxu0 0.0
    %575 = vmatprep.subr.mxu0 0.0
    %576 = vmatpush1.msra.mxu0 0.0
    %577 = vmatprep.subr.mxu0 0.0
    %578 = vmatpush1.msra.mxu0 0.0
    %579 = vmatprep.subr.mxu0 0.0
    %580 = vmatpush1.msra.mxu0 0.0
    %581 = vmatprep.subr.mxu0 0.0
    %582 = vmatpush1.msra.mxu0 0.0
    %583 = vmatprep.mubr.f32.mxu0 %v508
    %584 = vmatmul.mubr.f32.gmra.mrb[0].mxu0 %v472
    %v585 = vpop.f32.mrb[0].mxu0
    %v586 = vadd.f32 %v505, %v585
    %v587 = vpop.f32.mrb[0].mxu0
    %588 = vmatprep.mubr.f32.mxu0 %v511
    %589 = vmatmul.mubr.f32.gmra.mrb[0].mxu0 %v473
    %v590 = vpop.f32.mrb[0].mxu0
    %v591 = vadd.f32 %v505, %v590
    %v592 = vpop.f32.mrb[0].mxu0
    %593 = vmatprep.mubr.f32.mxu0 %v514
    %594 = vmatmul.mubr.f32.gmra.mrb[0].mxu0 %v474
    %v595 = vpop.f32.mrb[0].mxu0
    %v596 = vadd.f32 %v505, %v595
    %v597 = vpop.f32.mrb[0].mxu0
    %598 = vmatprep.mubr.f32.mxu0 %v517
    %599 = vmatmul.mubr.f32.gmra.mrb[0].mxu0 %v475
    %v600 = vpop.f32.mrb[0].mxu0
    %v601 = vadd.f32 %v505, %v600
    %v602 = vpop.f32.mrb[0].mxu0
    %603 = vdwg.mxu0
    %v604 = vmax.f32 %v586, 0.0
    %v605 = vmax.f32 %v591, 0.0
    %v606 = vmax.f32 %v596, 0.0
    %v607 = vmax.f32 %v601, 0.0
    %v608 = vrot.slane %v604, 7
    %v609 = vrot.slane %v605, 7
    %v610 = vrot.slane %v606, 7
    %v611 = vrot.slane %v607, 7
    %v612 = vsel %vm247, %v610, %v611
    %v613 = vsel %vm247, %v609, %v610
    %v614 = vsel %vm247, %v608, %v609
    %v615 = vsel %vm247, %v611, %v608
    %v616 = vmul.f32 %v227, %v615
    %v617 = vmul.f32 %v228, %v614
    %v618 = vmul.f32 %v229, %v613
    %v619 = vmul.f32 %v230, %v612
    %v620 = vrot.slane %v604, 1
    %v621 = vrot.slane %v605, 1
    %v622 = vrot.slane %v606, 1
    %v623 = vrot.slane %v607, 1
    %v624 = vsel %vm260, %v622, %v623
    %v625 = vsel %vm260, %v621, %v622
    %v626 = vsel %vm260, %v620, %v621
    %v627 = vsel %vm260, %v623, %v620
    %v628 = vmul.f32 %v239, %v626
    %v629 = vmul.f32 %v240, %v625
    %v630 = vmul.f32 %v241, %v624
    %v631 = vmul.f32 %v242, %v627
    %636 = vrot.lane.b32.xlu0 %v604, 32
    %v637 = vpop.permute.xlu0 %636
    %638 = vrot.lane.b32.xlu0 %v605, 32
    %v639 = vpop.permute.xlu0 %638
    %640 = vrot.lane.b32.xlu0 %v606, 32
    %v641 = vpop.permute.xlu0 %640
    %642 = vrot.lane.b32.xlu0 %v607, 32
    %v643 = vpop.permute.xlu0 %642
    %652 = vrot.lane.b32.xlu0 %v628, 64
    %v653 = vpop.permute.xlu0 %652
    %654 = vrot.lane.b32.xlu0 %v629, 64
    %v655 = vpop.permute.xlu0 %654
    %656 = vrot.lane.b32.xlu0 %v630, 64
    %v657 = vpop.permute.xlu0 %656
    %658 = vrot.lane.b32.xlu0 %v631, 64
    %v659 = vpop.permute.xlu0 %658
    %v664 = vsel %vm301, %v616, %v637
    %v665 = vsel %vm301, %v617, %v639
    %v666 = vsel %vm301, %v618, %v641
    %v667 = vsel %vm301, %v619, %v643
    %v668 = vsel %vm306, %v664, %v653
    %v669 = vsel %vm306, %v665, %v655
    %v670 = vsel %vm306, %v666, %v657
    %v671 = vsel %vm306, %v667, %v659
    %v672 = vld [vmem:[%s7] sm:$0xff]
    %v673 = vld [vmem:[%s7 + $0x8] sm:$0xff]
    %v674 = vld [vmem:[%s7 + $0x10] sm:$0xff]
    %v675 = vld [vmem:[%s7 + $0x18] sm:$0xff]
    %v676 = vld [vmem:[%s7 + $0x20] sm:$0xff]
    %v677 = vld [vmem:[%s7 + $0x28] sm:$0xff]
    %v678 = vld [vmem:[%s7 + $0x30] sm:$0xff]
    %v679 = vld [vmem:[%s7 + $0x38] sm:$0xff]
    %v680 = vld [vmem:[%s7 + $0x40] sm:$0xff]
    %v681 = vld [vmem:[%s7 + $0x48] sm:$0xff]
    %v682 = vld [vmem:[%s7 + $0x50] sm:$0xff]
    %v683 = vld [vmem:[%s7 + $0x58] sm:$0xff]
    %v684 = vld [vmem:[%s8] sm:$0x1]
    %v686 = vlaneseq
    %v687 = vshrl.u32 %v686, 7
    %v688 = vsub.s32 0, %v687
    %v689 = vrot.slane %v684, %v688
    %v692 = vsel %vm330, %v668, 0
    %v695 = vsel %vm330, %v669, 0
    %v698 = vsel %vm330, %v670, 0
    %v701 = vsel %vm330, %v671, 0
    %703 = vmatprep.subr.mxu0 0.0
    %704 = vmatpush1.msra.mxu0 %v672
    %705 = vmatprep.subr.mxu0 0.0
    %706 = vmatpush1.msra.mxu0 %v673
    %707 = vmatprep.subr.mxu0 0.0
    %708 = vmatpush1.msra.mxu0 %v674
    %709 = vmatprep.subr.mxu0 0.0
    %710 = vmatpush1.msra.mxu0 %v675
    %711 = vmatprep.subr.mxu0 0.0
    %712 = vmatpush1.msra.mxu0 %v676
    %713 = vmatprep.subr.mxu0 0.0
    %714 = vmatpush1.msra.mxu0 %v677
    %715 = vmatprep.subr.mxu0 0.0
    %716 = vmatpush1.msra.mxu0 %v678
    %717 = vmatprep.subr.mxu0 0.0
    %718 = vmatpush1.msra.mxu0 %v679
    %719 = vmatprep.subr.mxu0 0.0
    %720 = vmatpush1.msra.mxu0 %v680
    %721 = vmatprep.subr.mxu0 0.0
    %722 = vmatpush1.msra.mxu0 %v681
    %723 = vmatprep.subr.mxu0 0.0
    %724 = vmatpush1.msra.mxu0 %v682
    %725 = vmatprep.subr.mxu0 0.0
    %726 = vmatpush1.msra.mxu0 %v683
    %727 = vmatprep.subr.mxu0 0.0
    %728 = vmatpush1.msra.mxu0 0.0
    %729 = vmatprep.subr.mxu0 0.0
    %730 = vmatpush1.msra.mxu0 0.0
    %731 = vmatprep.subr.mxu0 0.0
    %732 = vmatpush1.msra.mxu0 0.0
    %733 = vmatprep.subr.mxu0 0.0
    %734 = vmatpush1.msra.mxu0 0.0
    %735 = vmatprep.subr.mxu0 0.0
    %736 = vmatpush1.msra.mxu0 0.0
    %737 = vmatprep.subr.mxu0 0.0
    %738 = vmatpush1.msra.mxu0 0.0
    %739 = vmatprep.subr.mxu0 0.0
    %740 = vmatpush1.msra.mxu0 0.0
    %741 = vmatprep.subr.mxu0 0.0
    %742 = vmatpush1.msra.mxu0 0.0
    %743 = vmatprep.subr.mxu0 0.0
    %744 = vmatpush1.msra.mxu0 0.0
    %745 = vmatprep.subr.mxu0 0.0
    %746 = vmatpush1.msra.mxu0 0.0
    %747 = vmatprep.subr.mxu0 0.0
    %748 = vmatpush1.msra.mxu0 0.0
    %749 = vmatprep.subr.mxu0 0.0
    %750 = vmatpush1.msra.mxu0 0.0
    %751 = vmatprep.subr.mxu0 0.0
    %752 = vmatpush1.msra.mxu0 0.0
    %753 = vmatprep.subr.mxu0 0.0
    %754 = vmatpush1.msra.mxu0 0.0
    %755 = vmatprep.subr.mxu0 0.0
    %756 = vmatpush1.msra.mxu0 0.0
    %757 = vmatprep.subr.mxu0 0.0
    %758 = vmatpush1.msra.mxu0 0.0
    %759 = vmatprep.subr.mxu0 0.0
    %760 = vmatpush1.msra.mxu0 0.0
    %761 = vmatprep.subr.mxu0 0.0
    %762 = vmatpush1.msra.mxu0 0.0
    %763 = vmatprep.subr.mxu0 0.0
    %764 = vmatpush1.msra.mxu0 0.0
    %765 = vmatprep.subr.mxu0 0.0
    %766 = vmatpush1.msra.mxu0 0.0
    %767 = vmatprep.mubr.f32.mxu0 0.0
    %768 = vmatmul.mubr.f32.gmra.mrb[0].mxu0 %v692
    %v769 = vpop.f32.mrb[0].mxu0
    %v770 = vadd.f32 %v689, %v769
    %v771 = vpop.f32.mrb[0].mxu0
    %772 = vmatprep.mubr.f32.mxu0 0.0
    %773 = vmatmul.mubr.f32.gmra.mrb[0].mxu0 %v695
    %v774 = vpop.f32.mrb[0].mxu0
    %v775 = vadd.f32 %v689, %v774
    %v776 = vpop.f32.mrb[0].mxu0
    %777 = vmatprep.mubr.f32.mxu0 0.0
    %778 = vmatmul.mubr.f32.gmra.mrb[0].mxu0 %v698
    %v779 = vpop.f32.mrb[0].mxu0
    %v780 = vadd.f32 %v689, %v779
    %v781 = vpop.f32.mrb[0].mxu0
    %782 = vmatprep.mubr.f32.mxu0 0.0
    %783 = vmatmul.mubr.f32.gmra.mrb[0].mxu0 %v701
    %v784 = vpop.f32.mrb[0].mxu0
    %v785 = vadd.f32 %v689, %v784
    %v786 = vpop.f32.mrb[0].mxu0
    %787 = vdwg.mxu0
    %vm788 = vcmask 31744
    %789 = vst.msk [vmem:[%s9] sm:$0xff] %vm788, %v770
    %790 = vst.msk [vmem:[%s9 + $0x8] sm:$0xff] %vm788, %v775
    %791 = vst.msk [vmem:[%s9 + $0x10] sm:$0xff] %vm788, %v780
    %792 = vst.msk [vmem:[%s9 + $0x18] sm:$0xff] %vm788, %v785
    // Predicated region
    $region42: #{conv1d_decoder_forward.1} parent=1 // pred_check
      _
    $region43: #{conv1d_decoder_forward.1} parent=1 // pred_check_branch
      %794 = sbr.rel (0) target = $region45
    $region44: #{conv1d_decoder_forward.1} parent=1 // pred_region
      _
    $region45: #{conv1d_decoder_forward.1} parent=1 // pred_fallthru
      _
    // Predicated region
    $region46: #{conv1d_decoder_forward.1} parent=1 // pred_check
      _
    $region47: #{conv1d_decoder_forward.1} parent=1 // pred_check_branch
      %796 = sbr.rel (0) target = $region49
    $region48: #{conv1d_decoder_forward.1} parent=1 // pred_region
      _
    $region49: #{conv1d_decoder_forward.1} parent=1 // pred_fallthru
      _
    %797 = vsyncpa [#allocation3], 1

</llo_original>
